<compile_context>
chip_gen: v7x
topology: tpu7x:2x2x1
jax: 0.10.0
libtpu: 0.0.40
codegen_flags: <defaults>
</compile_context>

<pallas_src>
import functools

import jax
import jax.numpy as jnp
from jax.experimental import pallas as pl
from jax.experimental.pallas import tpu as pltpu

HIDDEN = 64
LANE = 128


def _round_up(n, m):
    return (n + m - 1) // m * m


# ----------------------------------------------------------------------------
# Kernels
# ----------------------------------------------------------------------------
def _mlp_q(x_ref, w1_ref, b1_ref, w2_ref, b2_ref, wq_ref, bq_ref):
    """Shared body: fc1 -> relu -> fc2 -> relu -> folded dueling head.

    Returns the (tb, 128) f32 lane-padded Q tile.  Padded lanes are exact
    zeros (wq/bq are zero-padded).  Rows of a partial last batch tile contain
    garbage that flows through the matmuls and is discarded by the masked
    store -- fine because everything here is per-row.
    """
    cdt = w1_ref.dtype  # MXU operand dtype (bf16 default, f32 optional)
    x = x_ref[...].astype(cdt)  # in-kernel cast, hidden under the input DMA
    h1 = jnp.dot(x, w1_ref[...], preferred_element_type=jnp.float32) + b1_ref[...]
    h1 = jnp.maximum(h1, 0.0).astype(cdt)
    h2 = jnp.dot(h1, w2_ref[...], preferred_element_type=jnp.float32) + b2_ref[...]
    h2 = jnp.maximum(h2, 0.0).astype(cdt)
    return jnp.dot(h2, wq_ref[...], preferred_element_type=jnp.float32) + bq_ref[...]


def dueling_dqn_kernel(action_dim, x_ref, w1_ref, b1_ref, w2_ref, b2_ref,
                       wq_ref, bq_ref, q_ref):
    """Q-value kernel: unpadded (tb, action_dim) store."""
    q = _mlp_q(x_ref, w1_ref, b1_ref, w2_ref, b2_ref, wq_ref, bq_ref)
    q_ref[...] = q[:, :action_dim].astype(q_ref.dtype)


def dueling_dqn_greedy_kernel(action_dim, x_ref, w1_ref, b1_ref, w2_ref, b2_ref,
                              wq_ref, bq_ref, act_ref, qmax_ref):
    """Greedy-policy kernel: fused row-wise argmax + max-Q epilogue (XLU)."""
    q = _mlp_q(x_ref, w1_ref, b1_ref, w2_ref, b2_ref, wq_ref, bq_ref)
    lane = jax.lax.broadcasted_iota(jnp.int32, q.shape, 1)
    # Mask padded lanes to -inf so all-negative Q rows cannot pick a pad lane.
    qm = jnp.where(lane < action_dim, q, -jnp.inf)
    qmax = jnp.max(qm, axis=-1, keepdims=True)
    # First-occurrence argmax (matches torch): min lane index achieving qmax.
    first = jnp.min(jnp.where(qm == qmax, lane, q.shape[-1]),
                    axis=-1, keepdims=True)
    act_ref[...] = first.astype(act_ref.dtype)
    qmax_ref[...] = qmax.astype(qmax_ref.dtype)


# ----------------------------------------------------------------------------
# Host-side prep (one-time, zero per-step cost)
# ----------------------------------------------------------------------------
def _fold_head(params, action_dim, padded_actions):
    """Fold value + (advantage - mean(advantage)) into one head weight/bias.

    Exact:  q = h2 @ (wv + wa - mean_j(wa)) + (bv + ba - mean_j(ba)).
    The mean is taken over the real action_dim columns BEFORE zero-padding,
    so padded lanes are exact zeros.
    """
    wv, bv = params["wv"], params["bv"]            # (64, 1), (1, 1)
    wa, ba = params["wa"], params["ba"]            # (64, A), (1, A)
    wq = wv + wa - jnp.mean(wa, axis=1, keepdims=True)   # (64, A)
    bq = bv + ba - jnp.mean(ba, axis=1, keepdims=True)   # (1, A)
    pad = padded_actions - action_dim
    wq = jnp.pad(wq, ((0, 0), (0, pad)))
    bq = jnp.pad(bq, ((0, 0), (0, pad)))
    return wq, bq


def _prepare(params, compute_dtype):
    action_dim = params["wa"].shape[1]
    padded_actions = _round_up(action_dim, LANE)
    wq, bq = _fold_head(params, action_dim, padded_actions)
    w1 = params["w1"].astype(compute_dtype)
    w2 = params["w2"].astype(compute_dtype)
    wq = wq.astype(compute_dtype)
    b1 = params["b1"].astype(jnp.float32)
    b2 = params["b2"].astype(jnp.float32)
    bq = bq.astype(jnp.float32)
    return action_dim, (w1, b1, w2, b2, wq, bq)


def _batch_tile(B, batch_tile):
    """Pick a batch tile (multiple of 8, or full extent for tiny batches)."""
    batch_tile = max(8, _round_up(batch_tile, 8))
    if B > batch_tile:
        return batch_tile
    # Whole batch fits in one tile: split into >=2 grid steps so the
    # "parallel" grid axis can use both v7x TensorCores (no-op elsewhere).
    half = _round_up(pl.cdiv(B, 2), 8)
    return half if half < B else B


def _call(kernel, x, weights, tb, out_shape, out_specs):
    B, state_dim = x.shape
    const = lambda a: pl.BlockSpec(a.shape, lambda i, _nd=a.ndim: (0,) * _nd)
    return pl.pallas_call(
        kernel,
        out_shape=out_shape,
        grid=(pl.cdiv(B, tb),),
        in_specs=[pl.BlockSpec((tb, state_dim), lambda i: (i, 0))] +
                 [const(w) for w in weights],          # weights VMEM-resident
        out_specs=out_specs,
        compiler_params=pltpu.CompilerParams(
            dimension_semantics=("parallel",),          # 2 TCs on v7x
            vmem_limit_bytes=32 << 20),                 # covers v5e's 16MiB default
    )(x, *weights)


# ----------------------------------------------------------------------------
# Public wrappers
# ----------------------------------------------------------------------------
def dueling_dqn_forward(x, params, *, compute_dtype=jnp.bfloat16,
                        out_dtype=jnp.float32, batch_tile=2048):
    """Q values. x: (B, state_dim) float32 (or bf16). Returns (B, action_dim)."""
    B = x.shape[0]
    action_dim, weights = _prepare(params, compute_dtype)
    tb = _batch_tile(B, batch_tile)
    kernel = functools.partial(dueling_dqn_kernel, action_dim)
    return _call(
        kernel, x, weights, tb,
        jax.ShapeDtypeStruct((B, action_dim), out_dtype),
        pl.BlockSpec((tb, action_dim), lambda i: (i, 0)))


def dueling_dqn_greedy(x, params, *, compute_dtype=jnp.bfloat16, batch_tile=2048):
    """Greedy policy: returns (argmax_action (B,), max_q (B,)) with the
    argmax/max fused into the kernel epilogue (4-8 B/sample writeback)."""
    B = x.shape[0]
    action_dim, weights = _prepare(params, compute_dtype)
    tb = _batch_tile(B, batch_tile)
    kernel = functools.partial(dueling_dqn_greedy_kernel, action_dim)
    act, qmax = _call(
        kernel, x, weights, tb,
        (jax.ShapeDtypeStruct((B, 1), jnp.int32),
         jax.ShapeDtypeStruct((B, 1), jnp.float32)),
        (pl.BlockSpec((tb, 1), lambda i: (i, 0)),
         pl.BlockSpec((tb, 1), lambda i: (i, 0))))
    return act[:, 0], qmax[:, 0]


# ----------------------------------------------------------------------------
# Init + pure-JAX reference (mirrors the PyTorch module)
# ----------------------------------------------------------------------------
def init_params(key, state_dim, action_dim):
    """PyTorch-style nn.Linear init (U[-1/sqrt(fan_in), 1/sqrt(fan_in)]).
    Weights stored pre-transposed as (in_features, out_features)."""
    def linear(k, fan_in, fan_out):
        kw, kb = jax.random.split(k)
        bound = 1.0 / jnp.sqrt(fan_in)
        w = jax.random.uniform(kw, (fan_in, fan_out), jnp.float32, -bound, bound)
        b = jax.random.uniform(kb, (1, fan_out), jnp.float32, -bound, bound)
        return w, b

    k1, k2, k3, k4 = jax.random.split(key, 4)
    w1, b1 = linear(k1, state_dim, HIDDEN)
    w2, b2 = linear(k2, HIDDEN, HIDDEN)
    wv, bv = linear(k3, HIDDEN, 1)
    wa, ba = linear(k4, HIDDEN, action_dim)
    return dict(w1=w1, b1=b1, w2=w2, b2=b2, wv=wv, bv=bv, wa=wa, ba=ba)


def reference_forward(x, p):
    h1 = jnp.maximum(x @ p["w1"] + p["b1"], 0.0)
    h2 = jnp.maximum(h1 @ p["w2"] + p["b2"], 0.0)
    v = h2 @ p["wv"] + p["bv"]
    a = h2 @ p["wa"] + p["ba"]
    return v + (a - a.mean(axis=-1, keepdims=True))


if __name__ == "__main__":
    key = jax.random.PRNGKey(0)
    kx, kp, kx2 = jax.random.split(key, 3)

    state_dim, action_dim = 16, 8
    params = init_params(kp, state_dim, action_dim)

    # Small demo batch consistent with the original module usage.
    x = jax.random.normal(kx, (2, state_dim), jnp.float32)
    q_ref = reference_forward(x, params)

    # Exact f32-operand path (tight tolerance; head fold only reorders math).
    q_f32 = jax.block_until_ready(
        dueling_dqn_forward(x, params, compute_dtype=jnp.float32))
    assert q_f32.shape == (2, action_dim)
    assert jnp.allclose(q_f32, q_ref, atol=1e-4, rtol=1e-4)

    # Default bf16 MXU-operand path (f32 accumulation, f32 bias+ReLU).
    q_bf = jax.block_until_ready(dueling_dqn_forward(x, params))
    assert jnp.allclose(q_bf, q_ref, atol=1e-1, rtol=5e-2)

    # Optional bf16 output dtype (halves writeback).
    q_bf_out = jax.block_until_ready(
        dueling_dqn_forward(x, params, out_dtype=jnp.bfloat16))
    assert q_bf_out.dtype == jnp.bfloat16
    assert jnp.allclose(q_bf_out.astype(jnp.float32), q_ref, atol=2e-1, rtol=1e-1)

    # Larger batch: >=2 "parallel" grid steps + partial last tile.
    xb = jax.random.normal(kx2, (1000, state_dim), jnp.float32)
    qb_ref = reference_forward(xb, params)
    qb = jax.block_until_ready(
        dueling_dqn_forward(xb, params, compute_dtype=jnp.float32))
    assert qb.shape == (1000, action_dim)
    assert jnp.allclose(qb, qb_ref, atol=1e-4, rtol=1e-4)

    # Fused greedy-policy epilogue (argmax + max-Q), f32 path for exactness.
    act, qmax = dueling_dqn_greedy(xb, params, compute_dtype=jnp.float32)
    act = jax.block_until_ready(act)
    rows = jnp.arange(xb.shape[0])
    assert act.shape == (1000,) and act.dtype == jnp.int32
    assert jnp.all((act >= 0) & (act < action_dim))
    assert jnp.all(qb_ref[rows, act] >= qb_ref.max(axis=-1) - 1e-4)
    assert jnp.allclose(qmax, qb_ref.max(axis=-1), atol=1e-4, rtol=1e-4)

    print("KERNEL_OK")
</pallas_src>

<mosaic_0001>
module attributes {stable_mosaic.version = 11 : i64} {
  func.func @dueling_dqn_kernel(%arg0: i32, %arg1: memref<2x16xf32, #tpu.memory_space<vmem>>, %arg2: memref<16x64xf32, #tpu.memory_space<vmem>>, %arg3: memref<1x64xf32, #tpu.memory_space<vmem>>, %arg4: memref<64x64xf32, #tpu.memory_space<vmem>>, %arg5: memref<1x64xf32, #tpu.memory_space<vmem>>, %arg6: memref<64x128xf32, #tpu.memory_space<vmem>>, %arg7: memref<1x128xf32, #tpu.memory_space<vmem>>, %arg8: memref<2x8xf32, #tpu.memory_space<vmem>>) attributes {dimension_semantics = [#tpu.dimension_semantics<parallel>], iteration_bounds = array<i64: 1>, scalar_prefetch = 0 : i64, scratch_operands = 0 : i64, tpu.core_type = #tpu.core_type<tc>, window_params = [{transform_indices = @transform_0, window_bounds = array<i64: 2, 16>}, {pipeline_mode = #tpu.pipeline_mode<synchronous>, transform_indices = @transform_1, window_bounds = array<i64: 16, 64>}, {pipeline_mode = #tpu.pipeline_mode<synchronous>, transform_indices = @transform_2, window_bounds = array<i64: 1, 64>}, {pipeline_mode = #tpu.pipeline_mode<synchronous>, transform_indices = @transform_3, window_bounds = array<i64: 64, 64>}, {pipeline_mode = #tpu.pipeline_mode<synchronous>, transform_indices = @transform_4, window_bounds = array<i64: 1, 64>}, {pipeline_mode = #tpu.pipeline_mode<synchronous>, transform_indices = @transform_5, window_bounds = array<i64: 64, 128>}, {pipeline_mode = #tpu.pipeline_mode<synchronous>, transform_indices = @transform_6, window_bounds = array<i64: 1, 128>}, {transform_indices = @transform_7, window_bounds = array<i64: 2, 8>}]} {
    %c0 = arith.constant 0 : index
    %c0_0 = arith.constant 0 : index
    %0 = vector.load %arg1[%c0, %c0_0] : memref<2x16xf32, #tpu.memory_space<vmem>>, vector<2x16xf32>
    %c0_1 = arith.constant 0 : index
    %c0_2 = arith.constant 0 : index
    %1 = vector.load %arg2[%c0_1, %c0_2] : memref<16x64xf32, #tpu.memory_space<vmem>>, vector<16x64xf32>
    %cst = arith.constant dense<0.000000e+00> : vector<2x64xf32>
    %2 = tpu.matmul %0, %1, %cst {dimension_numbers = #tpu.dot_dimension_numbers<[1], [0], [0], [1], [0, 0, 1, 1], [], []>} : vector<2x16xf32>, vector<16x64xf32>, vector<2x64xf32> -> vector<2x64xf32>
    %c0_3 = arith.constant 0 : index
    %c0_4 = arith.constant 0 : index
    %3 = vector.load %arg3[%c0_3, %c0_4] : memref<1x64xf32, #tpu.memory_space<vmem>>, vector<1x64xf32>
    %4 = vector.broadcast %3 : vector<1x64xf32> to vector<2x64xf32>
    %5 = arith.addf %2, %4 : vector<2x64xf32>
    %cst_5 = arith.constant 0.000000e+00 : f32
    %6 = vector.broadcast %cst_5 : f32 to vector<2x64xf32>
    %7 = arith.maximumf %5, %6 : vector<2x64xf32>
    %c0_6 = arith.constant 0 : index
    %c0_7 = arith.constant 0 : index
    %8 = vector.load %arg4[%c0_6, %c0_7] : memref<64x64xf32, #tpu.memory_space<vmem>>, vector<64x64xf32>
    %cst_8 = arith.constant dense<0.000000e+00> : vector<2x64xf32>
    %9 = tpu.matmul %7, %8, %cst_8 {dimension_numbers = #tpu.dot_dimension_numbers<[1], [0], [0], [1], [0, 0, 1, 1], [], []>} : vector<2x64xf32>, vector<64x64xf32>, vector<2x64xf32> -> vector<2x64xf32>
    %c0_9 = arith.constant 0 : index
    %c0_10 = arith.constant 0 : index
    %10 = vector.load %arg5[%c0_9, %c0_10] : memref<1x64xf32, #tpu.memory_space<vmem>>, vector<1x64xf32>
    %11 = vector.broadcast %10 : vector<1x64xf32> to vector<2x64xf32>
    %12 = arith.addf %9, %11 : vector<2x64xf32>
    %cst_11 = arith.constant 0.000000e+00 : f32
    %13 = vector.broadcast %cst_11 : f32 to vector<2x64xf32>
    %14 = arith.maximumf %12, %13 : vector<2x64xf32>
    %c0_12 = arith.constant 0 : index
    %c0_13 = arith.constant 0 : index
    %15 = vector.load %arg6[%c0_12, %c0_13] : memref<64x128xf32, #tpu.memory_space<vmem>>, vector<64x128xf32>
    %cst_14 = arith.constant dense<0.000000e+00> : vector<2x128xf32>
    %16 = tpu.matmul %14, %15, %cst_14 {dimension_numbers = #tpu.dot_dimension_numbers<[1], [0], [0], [1], [0, 0, 1, 1], [], []>} : vector<2x64xf32>, vector<64x128xf32>, vector<2x128xf32> -> vector<2x128xf32>
    %c0_15 = arith.constant 0 : index
    %c0_16 = arith.constant 0 : index
    %17 = vector.load %arg7[%c0_15, %c0_16] : memref<1x128xf32, #tpu.memory_space<vmem>>, vector<1x128xf32>
    %18 = vector.broadcast %17 : vector<1x128xf32> to vector<2x128xf32>
    %19 = arith.addf %16, %18 : vector<2x128xf32>
    %20 = vector.extract_strided_slice %19 {offsets = [0, 0], sizes = [2, 8], strides = [1, 1]} : vector<2x128xf32> to vector<2x8xf32>
    %c0_17 = arith.constant 0 : index
    %c0_18 = arith.constant 0 : index
    %21 = vector.load %arg8[%c0_17, %c0_18] : memref<2x8xf32, #tpu.memory_space<vmem>>, vector<2x8xf32>
    tpu.vector_store %arg8[%c0_17, %c0_18], %20 {strides = array<i32>} : memref<2x8xf32, #tpu.memory_space<vmem>>, vector<2x8xf32>,
    return
  }
  func.func @transform_0(%arg0: i32) -> (i32, i32) {
    %c0_i32 = arith.constant 0 : i32
    %c0_i32_0 = arith.constant 0 : i32
    return %arg0, %c0_i32 : i32, i32
  }
  func.func @transform_1(%arg0: i32) -> (i32, i32) {
    %c0_i32 = arith.constant 0 : i32
    %c0_i32_0 = arith.constant 0 : i32
    %c0_i32_1 = arith.constant 0 : i32
    return %c0_i32, %c0_i32_0 : i32, i32
  }
  func.func @transform_2(%arg0: i32) -> (i32, i32) {
    %c0_i32 = arith.constant 0 : i32
    %c0_i32_0 = arith.constant 0 : i32
    %c0_i32_1 = arith.constant 0 : i32
    return %c0_i32, %c0_i32_0 : i32, i32
  }
  func.func @transform_3(%arg0: i32) -> (i32, i32) {
    %c0_i32 = arith.constant 0 : i32
    %c0_i32_0 = arith.constant 0 : i32
    %c0_i32_1 = arith.constant 0 : i32
    return %c0_i32, %c0_i32_0 : i32, i32
  }
  func.func @transform_4(%arg0: i32) -> (i32, i32) {
    %c0_i32 = arith.constant 0 : i32
    %c0_i32_0 = arith.constant 0 : i32
    %c0_i32_1 = arith.constant 0 : i32
    return %c0_i32, %c0_i32_0 : i32, i32
  }
  func.func @transform_5(%arg0: i32) -> (i32, i32) {
    %c0_i32 = arith.constant 0 : i32
    %c0_i32_0 = arith.constant 0 : i32
    %c0_i32_1 = arith.constant 0 : i32
    return %c0_i32, %c0_i32_0 : i32, i32
  }
  func.func @transform_6(%arg0: i32) -> (i32, i32) {
    %c0_i32 = arith.constant 0 : i32
    %c0_i32_0 = arith.constant 0 : i32
    %c0_i32_1 = arith.constant 0 : i32
    return %c0_i32, %c0_i32_0 : i32, i32
  }
  func.func @transform_7(%arg0: i32) -> (i32, i32) {
    %c0_i32 = arith.constant 0 : i32
    %c0_i32_0 = arith.constant 0 : i32
    return %arg0, %c0_i32 : i32, i32
  }
}

</mosaic_0001>

<llo_original>
// kernel: tpu_custom_call.1
$region0: #{tpu_custom_call.1}
  #allocation0 [shape = 'u32[]', space=smem, size = 0x4, offset = 0x4, fixed_abs, tag = 'smem constant byte address 0x4 - core index']
  #allocation1 [shape = 'u32[144,128]{1,0:T(1,128)}', space=vmem, size = 0x12000, scoped, tag = 'internal scratch']
  %s0 = inlined_call_operand.hbm [shape: f32[2,16], index: 0, kind: input, shape index: {}]
  %s1 = inlined_call_operand.hbm [shape: f32[16,64], index: 1, kind: input, shape index: {}]
  %s2 = inlined_call_operand.vmem [shape: f32[1,64], index: 2, kind: input, shape index: {}]
  %s3 = inlined_call_operand.hbm [shape: f32[64,64], index: 3, kind: input, shape index: {}]
  %s4 = inlined_call_operand.vmem [shape: f32[1,64], index: 4, kind: input, shape index: {}]
  %s5 = inlined_call_operand.hbm [shape: f32[64,128], index: 5, kind: input, shape index: {}]
  %s6 = inlined_call_operand.vmem [shape: f32[1,128], index: 6, kind: input, shape index: {}]
  %s7 = inlined_call_operand.hbm [shape: f32[2,8], index: 7, kind: output, shape index: {}]
  %s8 = sld [smem:[#allocation0]]
  $region54: #{tpu_custom_call.1} parent=0
    _
  %s10 = ssub.s32 1, %s8
  %s11 = scalar_select 0, %s10, %s8
  $region1: #{tpu_custom_call.1} parent=0
    #allocation2 [shape = 'u8[1024]{0}', space=vmem, size = 0x400, scoped, tag = 'input window, operand 0, single buffered']
    #allocation3 [shape = 's32[1]{0}', space=sflag, size = 0x4, scoped, tag = 'scoped memory for tpu_custom_call.1']
    #allocation4 [shape = 's32[1]{0}', space=sflag, size = 0x4, scoped, tag = 'scoped memory for tpu_custom_call.1']
    #allocation5 [shape = 'u8[8192]{0}', space=vmem, size = 0x2000, scoped, tag = 'input window, operand 1, single buffered']
    #allocation6 [shape = 's32[1]{0}', space=sflag, size = 0x4, scoped, tag = 'scoped memory for tpu_custom_call.1']
    #allocation7 [shape = 'u8[32768]{0}', space=vmem, size = 0x8000, scoped, tag = 'input window, operand 3, single buffered']
    #allocation8 [shape = 'u8[32768]{0}', space=vmem, size = 0x8000, scoped, tag = 'input window, operand 5, single buffered']
    #allocation9 [shape = 's32[1]{0}', space=sflag, size = 0x4, scoped, tag = 'scoped memory for tpu_custom_call.1']
    #allocation10 [shape = 'u8[1024]{0}', space=vmem, size = 0x400, scoped, tag = 'output window, operand 0, single buffered']
    %12 = vsyncpa [#allocation3], 0
    %13 = vsyncpa [#allocation6], 0
    %14 = vsyncpa [#allocation9], 0
    %15 = vsyncpa [#allocation4], 0
    // Predicated region
    $region2: #{tpu_custom_call.1} parent=1 // pred_check
      _
    $region3: #{tpu_custom_call.1} parent=1 // pred_check_branch
      %17 = sbr.rel (0) target = $region5
    $region4: #{tpu_custom_call.1} parent=1 // pred_region
      %s19 = ssub.s32 32, 32
      %20 = vsyncadd [#allocation3], %s19
      %s22 = sshll.u32 [#allocation2], 4
      %s23 = int_to_ptr.vmem [resolvable:$true] %s22
      %25 = dma.hbm_to_vmem [thread:$0]  %s0, 32, %s23, [#allocation3]
    $region5: #{tpu_custom_call.1} parent=1 // pred_fallthru
      _
    // Predicated region
    $region6: #{tpu_custom_call.1} parent=1 // pred_check
      _
    $region7: #{tpu_custom_call.1} parent=1 // pred_check_branch
      %27 = sbr.rel (0) target = $region9
    $region8: #{tpu_custom_call.1} parent=1 // pred_region
      %s29 = ssub.s32 256, 256
      %30 = vsyncadd [#allocation6], %s29
      %s31 = sshll.u32 [#allocation5], 4
      %s32 = int_to_ptr.vmem [resolvable:$true] %s31
      %37 = dma.hbm_to_vmem [thread:$0]  %s1, 256, %s32, [#allocation6], 128, 128, 8
    $region9: #{tpu_custom_call.1} parent=1 // pred_fallthru
      _
    // Predicated region
    $region10: #{tpu_custom_call.1} parent=1 // pred_check
      _
    $region11: #{tpu_custom_call.1} parent=1 // pred_check_branch
      %39 = sbr.rel (0) target = $region13
    $region12: #{tpu_custom_call.1} parent=1 // pred_region
      _
    $region13: #{tpu_custom_call.1} parent=1 // pred_fallthru
      _
    // Predicated region
    $region14: #{tpu_custom_call.1} parent=1 // pred_check
      _
    $region15: #{tpu_custom_call.1} parent=1 // pred_check_branch
      %41 = sbr.rel (0) target = $region17
    $region16: #{tpu_custom_call.1} parent=1 // pred_region
      %s43 = ssub.s32 1024, 1024
      %44 = vsyncadd [#allocation6], %s43
      %s45 = sshll.u32 [#allocation7], 4
      %s46 = int_to_ptr.vmem [resolvable:$true] %s45
      %51 = dma.hbm_to_vmem [thread:$0]  %s3, 1024, %s46, [#allocation6], 128, 128, 8
    $region17: #{tpu_custom_call.1} parent=1 // pred_fallthru
      _
    // Predicated region
    $region18: #{tpu_custom_call.1} parent=1 // pred_check
      _
    $region19: #{tpu_custom_call.1} parent=1 // pred_check_branch
      %53 = sbr.rel (0) target = $region21
    $region20: #{tpu_custom_call.1} parent=1 // pred_region
      _
    $region21: #{tpu_custom_call.1} parent=1 // pred_fallthru
      _
    // Predicated region
    $region22: #{tpu_custom_call.1} parent=1 // pred_check
      _
    $region23: #{tpu_custom_call.1} parent=1 // pred_check_branch
      %55 = sbr.rel (0) target = $region25
    $region24: #{tpu_custom_call.1} parent=1 // pred_region
      %s57 = ssub.s32 1024, 1024
      %58 = vsyncadd [#allocation9], %s57
      %s59 = sshll.u32 [#allocation8], 4
      %s60 = int_to_ptr.vmem [resolvable:$true] %s59
      %65 = dma.hbm_to_vmem [thread:$0]  %s5, 1024, %s60, [#allocation9], 128, 128, 8
    $region25: #{tpu_custom_call.1} parent=1 // pred_fallthru
      _
    // Predicated region
    $region26: #{tpu_custom_call.1} parent=1 // pred_check
      _
    $region27: #{tpu_custom_call.1} parent=1 // pred_check_branch
      %67 = sbr.rel (0) target = $region29
    $region28: #{tpu_custom_call.1} parent=1 // pred_region
      _
    $region29: #{tpu_custom_call.1} parent=1 // pred_fallthru
      _
    // Predicated region
    $region30: #{tpu_custom_call.1} parent=1 // pred_check
      _
    $region31: #{tpu_custom_call.1} parent=1 // pred_check_branch
      %69 = sbr.rel (0) target = $region33
    $region32: #{tpu_custom_call.1} parent=1 // pred_region
      %70 = dma.done [#allocation3], 32
    $region33: #{tpu_custom_call.1} parent=1 // pred_fallthru
      _
    // Predicated region
    $region34: #{tpu_custom_call.1} parent=1 // pred_check
      _
    $region35: #{tpu_custom_call.1} parent=1 // pred_check_branch
      %72 = sbr.rel (0) target = $region37
    $region36: #{tpu_custom_call.1} parent=1 // pred_region
      %73 = dma.done [#allocation6], 256
    $region37: #{tpu_custom_call.1} parent=1 // pred_fallthru
      _
    // Predicated region
    $region38: #{tpu_custom_call.1} parent=1 // pred_check
      _
    $region39: #{tpu_custom_call.1} parent=1 // pred_check_branch
      %75 = sbr.rel (0) target = $region41
    $region40: #{tpu_custom_call.1} parent=1 // pred_region
      %76 = dma.done [#allocation6], 1024
    $region41: #{tpu_custom_call.1} parent=1 // pred_fallthru
      _
    // Predicated region
    $region42: #{tpu_custom_call.1} parent=1 // pred_check
      _
    $region43: #{tpu_custom_call.1} parent=1 // pred_check_branch
      %78 = sbr.rel (0) target = $region45
    $region44: #{tpu_custom_call.1} parent=1 // pred_region
      %79 = dma.done [#allocation9], 1024
    $region45: #{tpu_custom_call.1} parent=1 // pred_fallthru
      _
    %v80 = vld [vmem:[#allocation2] sm:$0x3]
    %v81 = vld [vmem:[#allocation5] sm:$0xff]
    %v82 = vld [vmem:[#allocation5 + $0x8] sm:$0xff]
    %v83 = vld [vmem:[%s2] sm:$0x1]
    %v85 = vlaneseq
    %v86 = vshrl.u32 %v85, 7
    %v87 = vsub.s32 0, %v86
    %v88 = vrot.slane %v83, %v87
    %vm90 = vcmask 130048
    %v92 = vsel %vm90, %v80, 0
    %94 = vmatprep.subr.mxu0 0.0
    %95 = vmatpush1.msra.mxu0 %v81
    %96 = vmatprep.subr.mxu0 0.0
    %97 = vmatpush1.msra.mxu0 %v82
    %98 = vmatprep.subr.mxu0 0.0
    %99 = vmatpush1.msra.mxu0 0.0
    %100 = vmatprep.subr.mxu0 0.0
    %101 = vmatpush1.msra.mxu0 0.0
    %102 = vmatprep.subr.mxu0 0.0
    %103 = vmatpush1.msra.mxu0 0.0
    %104 = vmatprep.subr.mxu0 0.0
    %105 = vmatpush1.msra.mxu0 0.0
    %106 = vmatprep.subr.mxu0 0.0
    %107 = vmatpush1.msra.mxu0 0.0
    %108 = vmatprep.subr.mxu0 0.0
    %109 = vmatpush1.msra.mxu0 0.0
    %110 = vmatprep.subr.mxu0 0.0
    %111 = vmatpush1.msra.mxu0 0.0
    %112 = vmatprep.subr.mxu0 0.0
    %113 = vmatpush1.msra.mxu0 0.0
    %114 = vmatprep.subr.mxu0 0.0
    %115 = vmatpush1.msra.mxu0 0.0
    %116 = vmatprep.subr.mxu0 0.0
    %117 = vmatpush1.msra.mxu0 0.0
    %118 = vmatprep.subr.mxu0 0.0
    %119 = vmatpush1.msra.mxu0 0.0
    %120 = vmatprep.subr.mxu0 0.0
    %121 = vmatpush1.msra.mxu0 0.0
    %122 = vmatprep.subr.mxu0 0.0
    %123 = vmatpush1.msra.mxu0 0.0
    %124 = vmatprep.subr.mxu0 0.0
    %125 = vmatpush1.msra.mxu0 0.0
    %126 = vmatprep.subr.mxu0 0.0
    %127 = vmatpush1.msra.mxu0 0.0
    %128 = vmatprep.subr.mxu0 0.0
    %129 = vmatpush1.msra.mxu0 0.0
    %130 = vmatprep.subr.mxu0 0.0
    %131 = vmatpush1.msra.mxu0 0.0
    %132 = vmatprep.subr.mxu0 0.0
    %133 = vmatpush1.msra.mxu0 0.0
    %134 = vmatprep.subr.mxu0 0.0
    %135 = vmatpush1.msra.mxu0 0.0
    %136 = vmatprep.subr.mxu0 0.0
    %137 = vmatpush1.msra.mxu0 0.0
    %138 = vmatprep.subr.mxu0 0.0
    %139 = vmatpush1.msra.mxu0 0.0
    %140 = vmatprep.subr.mxu0 0.0
    %141 = vmatpush1.msra.mxu0 0.0
    %142 = vmatprep.subr.mxu0 0.0
    %143 = vmatpush1.msra.mxu0 0.0
    %144 = vmatprep.subr.mxu0 0.0
    %145 = vmatpush1.msra.mxu0 0.0
    %146 = vmatprep.subr.mxu0 0.0
    %147 = vmatpush1.msra.mxu0 0.0
    %148 = vmatprep.subr.mxu0 0.0
    %149 = vmatpush1.msra.mxu0 0.0
    %150 = vmatprep.subr.mxu0 0.0
    %151 = vmatpush1.msra.mxu0 0.0
    %152 = vmatprep.subr.mxu0 0.0
    %153 = vmatpush1.msra.mxu0 0.0
    %154 = vmatprep.subr.mxu0 0.0
    %155 = vmatpush1.msra.mxu0 0.0
    %156 = vmatprep.subr.mxu0 0.0
    %157 = vmatpush1.msra.mxu0 0.0
    %158 = vmatprep.mubr.f32.mxu0 0.0
    %159 = vmatmul.mubr.f32.gmra.mrb[0].mxu0 %v92
    %v160 = vpop.f32.mrb[0].mxu0
    %v161 = vadd.f32 %v88, %v160
    %v162 = vpop.f32.mrb[0].mxu0
    %163 = vdwg.mxu0
    %v164 = vmax.f32 %v161, 0.0
    %v165 = vld [vmem:[#allocation7] sm:$0xff]
    %v166 = vld [vmem:[#allocation7 + $0x8] sm:$0xff]
    %v167 = vld [vmem:[#allocation7 + $0x10] sm:$0xff]
    %v168 = vld [vmem:[#allocation7 + $0x18] sm:$0xff]
    %v169 = vld [vmem:[#allocation7 + $0x20] sm:$0xff]
    %v170 = vld [vmem:[#allocation7 + $0x28] sm:$0xff]
    %v171 = vld [vmem:[#allocation7 + $0x30] sm:$0xff]
    %v172 = vld [vmem:[#allocation7 + $0x38] sm:$0xff]
    %v173 = vld [vmem:[%s4] sm:$0x1]
    %v175 = vlaneseq
    %v176 = vshrl.u32 %v175, 7
    %v177 = vsub.s32 0, %v176
    %v178 = vrot.slane %v173, %v177
    %vm180 = vcmask 523264
    %v182 = vsel %vm180, %v164, 0
    %184 = vmatprep.subr.mxu0 0.0
    %185 = vmatpush1.msra.mxu0 %v165
    %186 = vmatprep.subr.mxu0 0.0
    %187 = vmatpush1.msra.mxu0 %v166
    %188 = vmatprep.subr.mxu0 0.0
    %189 = vmatpush1.msra.mxu0 %v167
    %190 = vmatprep.subr.mxu0 0.0
    %191 = vmatpush1.msra.mxu0 %v168
    %192 = vmatprep.subr.mxu0 0.0
    %193 = vmatpush1.msra.mxu0 %v169
    %194 = vmatprep.subr.mxu0 0.0
    %195 = vmatpush1.msra.mxu0 %v170
    %196 = vmatprep.subr.mxu0 0.0
    %197 = vmatpush1.msra.mxu0 %v171
    %198 = vmatprep.subr.mxu0 0.0
    %199 = vmatpush1.msra.mxu0 %v172
    %200 = vmatprep.subr.mxu0 0.0
    %201 = vmatpush1.msra.mxu0 0.0
    %202 = vmatprep.subr.mxu0 0.0
    %203 = vmatpush1.msra.mxu0 0.0
    %204 = vmatprep.subr.mxu0 0.0
    %205 = vmatpush1.msra.mxu0 0.0
    %206 = vmatprep.subr.mxu0 0.0
    %207 = vmatpush1.msra.mxu0 0.0
    %208 = vmatprep.subr.mxu0 0.0
    %209 = vmatpush1.msra.mxu0 0.0
    %210 = vmatprep.subr.mxu0 0.0
    %211 = vmatpush1.msra.mxu0 0.0
    %212 = vmatprep.subr.mxu0 0.0
    %213 = vmatpush1.msra.mxu0 0.0
    %214 = vmatprep.subr.mxu0 0.0
    %215 = vmatpush1.msra.mxu0 0.0
    %216 = vmatprep.subr.mxu0 0.0
    %217 = vmatpush1.msra.mxu0 0.0
    %218 = vmatprep.subr.mxu0 0.0
    %219 = vmatpush1.msra.mxu0 0.0
    %220 = vmatprep.subr.mxu0 0.0
    %221 = vmatpush1.msra.mxu0 0.0
    %222 = vmatprep.subr.mxu0 0.0
    %223 = vmatpush1.msra.mxu0 0.0
    %224 = vmatprep.subr.mxu0 0.0
    %225 = vmatpush1.msra.mxu0 0.0
    %226 = vmatprep.subr.mxu0 0.0
    %227 = vmatpush1.msra.mxu0 0.0
    %228 = vmatprep.subr.mxu0 0.0
    %229 = vmatpush1.msra.mxu0 0.0
    %230 = vmatprep.subr.mxu0 0.0
    %231 = vmatpush1.msra.mxu0 0.0
    %232 = vmatprep.subr.mxu0 0.0
    %233 = vmatpush1.msra.mxu0 0.0
    %234 = vmatprep.subr.mxu0 0.0
    %235 = vmatpush1.msra.mxu0 0.0
    %236 = vmatprep.subr.mxu0 0.0
    %237 = vmatpush1.msra.mxu0 0.0
    %238 = vmatprep.subr.mxu0 0.0
    %239 = vmatpush1.msra.mxu0 0.0
    %240 = vmatprep.subr.mxu0 0.0
    %241 = vmatpush1.msra.mxu0 0.0
    %242 = vmatprep.subr.mxu0 0.0
    %243 = vmatpush1.msra.mxu0 0.0
    %244 = vmatprep.subr.mxu0 0.0
    %245 = vmatpush1.msra.mxu0 0.0
    %246 = vmatprep.subr.mxu0 0.0
    %247 = vmatpush1.msra.mxu0 0.0
    %248 = vmatprep.mubr.f32.mxu0 0.0
    %249 = vmatmul.mubr.f32.gmra.mrb[0].mxu0 %v182
    %v250 = vpop.f32.mrb[0].mxu0
    %v251 = vadd.f32 %v178, %v250
    %v252 = vpop.f32.mrb[0].mxu0
    %253 = vdwg.mxu0
    %v254 = vmax.f32 %v251, 0.0
    %v255 = vld [vmem:[#allocation8] sm:$0xff]
    %v256 = vld [vmem:[#allocation8 + $0x8] sm:$0xff]
    %v257 = vld [vmem:[#allocation8 + $0x10] sm:$0xff]
    %v258 = vld [vmem:[#allocation8 + $0x18] sm:$0xff]
    %v259 = vld [vmem:[#allocation8 + $0x20] sm:$0xff]
    %v260 = vld [vmem:[#allocation8 + $0x28] sm:$0xff]
    %v261 = vld [vmem:[#allocation8 + $0x30] sm:$0xff]
    %v262 = vld [vmem:[#allocation8 + $0x38] sm:$0xff]
    %v263 = vld [vmem:[%s6] sm:$0x1]
    %v265 = vlaneseq
    %v266 = vshrl.u32 %v265, 7
    %v267 = vsub.s32 0, %v266
    %v268 = vrot.slane %v263, %v267
    %v271 = vsel %vm180, %v254, 0
    %273 = vmatprep.subr.mxu0 0.0
    %274 = vmatpush1.msra.mxu0 %v255
    %275 = vmatprep.subr.mxu0 0.0
    %276 = vmatpush1.msra.mxu0 %v256
    %277 = vmatprep.subr.mxu0 0.0
    %278 = vmatpush1.msra.mxu0 %v257
    %279 = vmatprep.subr.mxu0 0.0
    %280 = vmatpush1.msra.mxu0 %v258
    %281 = vmatprep.subr.mxu0 0.0
    %282 = vmatpush1.msra.mxu0 %v259
    %283 = vmatprep.subr.mxu0 0.0
    %284 = vmatpush1.msra.mxu0 %v260
    %285 = vmatprep.subr.mxu0 0.0
    %286 = vmatpush1.msra.mxu0 %v261
    %287 = vmatprep.subr.mxu0 0.0
    %288 = vmatpush1.msra.mxu0 %v262
    %289 = vmatprep.subr.mxu0 0.0
    %290 = vmatpush1.msra.mxu0 0.0
    %291 = vmatprep.subr.mxu0 0.0
    %292 = vmatpush1.msra.mxu0 0.0
    %293 = vmatprep.subr.mxu0 0.0
    %294 = vmatpush1.msra.mxu0 0.0
    %295 = vmatprep.subr.mxu0 0.0
    %296 = vmatpush1.msra.mxu0 0.0
    %297 = vmatprep.subr.mxu0 0.0
    %298 = vmatpush1.msra.mxu0 0.0
    %299 = vmatprep.subr.mxu0 0.0
    %300 = vmatpush1.msra.mxu0 0.0
    %301 = vmatprep.subr.mxu0 0.0
    %302 = vmatpush1.msra.mxu0 0.0
    %303 = vmatprep.subr.mxu0 0.0
    %304 = vmatpush1.msra.mxu0 0.0
    %305 = vmatprep.subr.mxu0 0.0
    %306 = vmatpush1.msra.mxu0 0.0
    %307 = vmatprep.subr.mxu0 0.0
    %308 = vmatpush1.msra.mxu0 0.0
    %309 = vmatprep.subr.mxu0 0.0
    %310 = vmatpush1.msra.mxu0 0.0
    %311 = vmatprep.subr.mxu0 0.0
    %312 = vmatpush1.msra.mxu0 0.0
    %313 = vmatprep.subr.mxu0 0.0
    %314 = vmatpush1.msra.mxu0 0.0
    %315 = vmatprep.subr.mxu0 0.0
    %316 = vmatpush1.msra.mxu0 0.0
    %317 = vmatprep.subr.mxu0 0.0
    %318 = vmatpush1.msra.mxu0 0.0
    %319 = vmatprep.subr.mxu0 0.0
    %320 = vmatpush1.msra.mxu0 0.0
    %321 = vmatprep.subr.mxu0 0.0
    %322 = vmatpush1.msra.mxu0 0.0
    %323 = vmatprep.subr.mxu0 0.0
    %324 = vmatpush1.msra.mxu0 0.0
    %325 = vmatprep.subr.mxu0 0.0
    %326 = vmatpush1.msra.mxu0 0.0
    %327 = vmatprep.subr.mxu0 0.0
    %328 = vmatpush1.msra.mxu0 0.0
    %329 = vmatprep.subr.mxu0 0.0
    %330 = vmatpush1.msra.mxu0 0.0
    %331 = vmatprep.subr.mxu0 0.0
    %332 = vmatpush1.msra.mxu0 0.0
    %333 = vmatprep.subr.mxu0 0.0
    %334 = vmatpush1.msra.mxu0 0.0
    %335 = vmatprep.subr.mxu0 0.0
    %336 = vmatpush1.msra.mxu0 0.0
    %337 = vmatprep.mubr.f32.mxu0 0.0
    %338 = vmatmul.mubr.f32.gmra.mrb[0].mxu0 %v271
    %v339 = vpop.f32.mrb[0].mxu0
    %v340 = vadd.f32 %v268, %v339
    %v341 = vpop.f32.mrb[0].mxu0
    %342 = vdwg.mxu0
    %vm343 = vcmask 58368
    %344 = vst.msk [vmem:[#allocation10] sm:$0x3] %vm343, %v340
    // Predicated region
    $region46: #{tpu_custom_call.1} parent=1 // pred_check
      _
    $region47: #{tpu_custom_call.1} parent=1 // pred_check_branch
      %346 = sbr.rel (0) target = $region49
    $region48: #{tpu_custom_call.1} parent=1 // pred_region
      %s348 = ssub.s32 32, 32
      %349 = vsyncadd [#allocation4], %s348
      %s351 = sshll.u32 [#allocation10], 4
      %s352 = int_to_ptr.vmem [resolvable:$true] %s351
      %354 = dma.vmem_to_hbm [thread:$0]  %s352, 32, %s7, [#allocation4]
    $region49: #{tpu_custom_call.1} parent=1 // pred_fallthru
      _
    // Predicated region
    $region50: #{tpu_custom_call.1} parent=1 // pred_check
      _
    $region51: #{tpu_custom_call.1} parent=1 // pred_check_branch
      %356 = sbr.rel (0) target = $region53
    $region52: #{tpu_custom_call.1} parent=1 // pred_region
      %357 = dma.done [#allocation4], 32
    $region53: #{tpu_custom_call.1} parent=1 // pred_fallthru
      _
    %358 = vsyncpa [#allocation3], 1
    %359 = vsyncpa [#allocation6], 1
    %360 = vsyncpa [#allocation9], 1
    %361 = vsyncpa [#allocation4], 1

</llo_original>
